<compile_context>
chip_gen: v5e
topology: v5e:2x2
jax: 0.10.0
libtpu: 0.0.40
codegen_flags: <defaults>
</compile_context>

<pallas_src>
import math

import jax
import jax.numpy as jnp
from jax.experimental import pallas as pl
from jax.experimental.pallas import tpu as pltpu

# Problem sizes (lane dims are multiples of 128 where it matters).
BATCH = 512        # number of particles (exercises the tiled/parallel grid path)
LATENT_DIM = 32
FULL_DIM = 128     # decoder output dim
OBS_DIM = 128      # observation dim
SIGMA = 0.1        # noise std of the Normal noise distribution

TILE_M = 256       # batch tile: fills the 256-row MXU on v6e/v7x, 2x128 on v5e

# Folded Gaussian constants (Python scalars, baked into the kernel).
_NEG_HALF_INV_VAR = -0.5 / (SIGMA * SIGMA)
_LOG_NORM_CONST = -math.log(SIGMA) - 0.5 * math.log(2.0 * math.pi)


def _log_likelihood_kernel(pred_ref, obs_ref, w1_ref, b1_ref, w2_ref, ll_ref):
    # decoder: Linear + tanh   (MXU matmul, f32 accumulation; tanh on EUP)
    h = jnp.tanh(
        jnp.dot(pred_ref[...], w1_ref[...], preferred_element_type=jnp.float32)
        + b1_ref[...]
    )
    # obs_operator: Linear (no bias)
    y = jnp.dot(h, w2_ref[...], preferred_element_type=jnp.float32)
    # discrepancy: obs is (1, obs_dim) and broadcasts over the batch rows
    diff = y - obs_ref[...]
    # Gaussian log_prob summed over the observation dimension, with the
    # constants folded: (-0.5/sigma^2) * sum(diff^2) + obs_dim * log_norm_const
    obs_dim = obs_ref.shape[1]
    ll_ref[...] = (
        _NEG_HALF_INV_VAR * jnp.sum(diff * diff, axis=1, keepdims=True)
        + obs_dim * _LOG_NORM_CONST
    )


def log_likelihood(pred, obs, w1, b1, w2, *, tile_m=TILE_M):
    """pred: (batch, latent_dim) f32, obs: (1, obs_dim) f32 -> (batch,) f32."""
    batch, latent_dim = pred.shape
    obs_dim = obs.shape[1]
    full_dim = w1.shape[1]

    # Small-batch fallback: a single whole-array block (still correct & clean).
    tile_m = min(tile_m, batch)
    grid_m = pl.cdiv(batch, tile_m)
    padded = grid_m * tile_m
    if padded != batch:
        # Pad particles to a multiple of the tile; padded rows are discarded.
        pred = jnp.pad(pred, ((0, padded - batch), (0, 0)))

    out = pl.pallas_call(
        _log_likelihood_kernel,
        out_shape=jax.ShapeDtypeStruct((padded, 1), jnp.float32),
        grid=(grid_m,),
        in_specs=[
            # Batch-tiled particles: one tile per grid step.
            pl.BlockSpec((tile_m, latent_dim), lambda i: (i, 0)),
            # Observation / weights / bias: block index constant across the
            # grid, so they are fetched once and stay resident in VMEM.
            pl.BlockSpec((1, obs_dim), lambda i: (0, 0)),
            pl.BlockSpec((latent_dim, full_dim), lambda i: (0, 0)),
            pl.BlockSpec((1, full_dim), lambda i: (0, 0)),
            pl.BlockSpec((full_dim, obs_dim), lambda i: (0, 0)),
        ],
        out_specs=pl.BlockSpec((tile_m, 1), lambda i: (i, 0)),
        compiler_params=pltpu.CompilerParams(
            # Batch tiles are independent -> parallel (v7x megacore sharding).
            dimension_semantics=("parallel",),
        ),
    )(pred, obs, w1, b1, w2)
    return out[:batch, 0]  # match PyTorch return shape (batch,)


def _reference(pred, obs, w1, b1, w2):
    h = jnp.tanh(pred @ w1 + b1)
    y = h @ w2
    diff = y - obs  # broadcast of (1, obs_dim)
    logp = -0.5 * (diff / SIGMA) ** 2 + _LOG_NORM_CONST
    return jnp.sum(logp, axis=1)


if __name__ == "__main__":
    key = jax.random.PRNGKey(0)
    k_pred, k_obs, k_w1, k_b1, k_w2 = jax.random.split(key, 5)

    # Deterministic synthetic parameters (decoder + obs_operator weights).
    w1 = jax.random.normal(k_w1, (LATENT_DIM, FULL_DIM), jnp.float32) * 0.1
    b1 = jax.random.normal(k_b1, (1, FULL_DIM), jnp.float32) * 0.1
    w2 = jax.random.normal(k_w2, (FULL_DIM, OBS_DIM), jnp.float32) * 0.1

    # Inputs: particle latents and a single observation.
    pred = jax.random.normal(k_pred, (BATCH, LATENT_DIM), jnp.float32)
    obs = jax.random.normal(k_obs, (1, OBS_DIM), jnp.float32)

    ll = jax.block_until_ready(log_likelihood(pred, obs, w1, b1, w2))
    ll_ref = _reference(pred, obs, w1, b1, w2)

    assert ll.shape == (BATCH,)
    assert jnp.allclose(ll, ll_ref, rtol=1e-4, atol=1e-3), (ll, ll_ref)

    # Also exercise the small-batch / non-multiple-of-tile path.
    ll_small = jax.block_until_ready(
        log_likelihood(pred[:8], obs, w1, b1, w2)
    )
    assert jnp.allclose(ll_small, ll_ref[:8], rtol=1e-4, atol=1e-3)

    print("KERNEL_OK")
</pallas_src>

<mosaic_0001>
module attributes {stable_mosaic.version = 11 : i64} {
  func.func @_log_likelihood_kernel(%arg0: i32, %arg1: memref<256x32xf32, #tpu.memory_space<vmem>>, %arg2: memref<1x128xf32, #tpu.memory_space<vmem>>, %arg3: memref<32x128xf32, #tpu.memory_space<vmem>>, %arg4: memref<1x128xf32, #tpu.memory_space<vmem>>, %arg5: memref<128x128xf32, #tpu.memory_space<vmem>>, %arg6: memref<256x1xf32, #tpu.memory_space<vmem>>) attributes {dimension_semantics = [#tpu.dimension_semantics<parallel>], iteration_bounds = array<i64: 2>, scalar_prefetch = 0 : i64, scratch_operands = 0 : i64, tpu.core_type = #tpu.core_type<tc>, window_params = [{transform_indices = @transform_0, window_bounds = array<i64: 256, 32>}, {pipeline_mode = #tpu.pipeline_mode<synchronous>, transform_indices = @transform_1, window_bounds = array<i64: 1, 128>}, {pipeline_mode = #tpu.pipeline_mode<synchronous>, transform_indices = @transform_2, window_bounds = array<i64: 32, 128>}, {pipeline_mode = #tpu.pipeline_mode<synchronous>, transform_indices = @transform_3, window_bounds = array<i64: 1, 128>}, {pipeline_mode = #tpu.pipeline_mode<synchronous>, transform_indices = @transform_4, window_bounds = array<i64: 128, 128>}, {transform_indices = @transform_5, window_bounds = array<i64: 256, 1>}]} {
    %c0 = arith.constant 0 : index
    %c0_0 = arith.constant 0 : index
    %0 = vector.load %arg1[%c0, %c0_0] : memref<256x32xf32, #tpu.memory_space<vmem>>, vector<256x32xf32>
    %c0_1 = arith.constant 0 : index
    %c0_2 = arith.constant 0 : index
    %1 = vector.load %arg3[%c0_1, %c0_2] : memref<32x128xf32, #tpu.memory_space<vmem>>, vector<32x128xf32>
    %cst = arith.constant dense<0.000000e+00> : vector<256x128xf32>
    %2 = tpu.matmul %0, %1, %cst {dimension_numbers = #tpu.dot_dimension_numbers<[1], [0], [0], [1], [0, 0, 1, 1], [], []>} : vector<256x32xf32>, vector<32x128xf32>, vector<256x128xf32> -> vector<256x128xf32>
    %c0_3 = arith.constant 0 : index
    %c0_4 = arith.constant 0 : index
    %3 = vector.load %arg4[%c0_3, %c0_4] : memref<1x128xf32, #tpu.memory_space<vmem>>, vector<1x128xf32>
    %4 = vector.broadcast %3 : vector<1x128xf32> to vector<256x128xf32>
    %5 = arith.addf %2, %4 : vector<256x128xf32>
    %6 = math.tanh %5 : vector<256x128xf32>
    %c0_5 = arith.constant 0 : index
    %c0_6 = arith.constant 0 : index
    %7 = vector.load %arg5[%c0_5, %c0_6] : memref<128x128xf32, #tpu.memory_space<vmem>>, vector<128x128xf32>
    %cst_7 = arith.constant dense<0.000000e+00> : vector<256x128xf32>
    %8 = tpu.matmul %6, %7, %cst_7 {dimension_numbers = #tpu.dot_dimension_numbers<[1], [0], [0], [1], [0, 0, 1, 1], [], []>} : vector<256x128xf32>, vector<128x128xf32>, vector<256x128xf32> -> vector<256x128xf32>
    %c0_8 = arith.constant 0 : index
    %c0_9 = arith.constant 0 : index
    %9 = vector.load %arg2[%c0_8, %c0_9] : memref<1x128xf32, #tpu.memory_space<vmem>>, vector<1x128xf32>
    %10 = vector.broadcast %9 : vector<1x128xf32> to vector<256x128xf32>
    %11 = arith.subf %8, %10 : vector<256x128xf32>
    %12 = arith.mulf %11, %11 : vector<256x128xf32>
    %cst_10 = arith.constant dense<0.000000e+00> : vector<256xf32>
    %13 = vector.multi_reduction <add>, %12, %cst_10 [1] : vector<256x128xf32> to vector<256xf32>
    %14 = vector.shape_cast %13 : vector<256xf32> to vector<256x1xf32>
    %cst_11 = arith.constant -5.000000e+01 : f32
    %15 = vector.broadcast %cst_11 : f32 to vector<256x1xf32>
    %16 = arith.mulf %15, %14 : vector<256x1xf32>
    %cst_12 = arith.constant 177.106766 : f32
    %17 = vector.broadcast %cst_12 : f32 to vector<256x1xf32>
    %18 = arith.addf %16, %17 : vector<256x1xf32>
    %c0_13 = arith.constant 0 : index
    %c0_14 = arith.constant 0 : index
    %19 = vector.load %arg6[%c0_13, %c0_14] : memref<256x1xf32, #tpu.memory_space<vmem>>, vector<256x1xf32>
    tpu.vector_store %arg6[%c0_13, %c0_14], %18 {strides = array<i32>} : memref<256x1xf32, #tpu.memory_space<vmem>>, vector<256x1xf32>,
    return
  }
  func.func @transform_0(%arg0: i32) -> (i32, i32) {
    %c0_i32 = arith.constant 0 : i32
    %c0_i32_0 = arith.constant 0 : i32
    return %arg0, %c0_i32 : i32, i32
  }
  func.func @transform_1(%arg0: i32) -> (i32, i32) {
    %c0_i32 = arith.constant 0 : i32
    %c0_i32_0 = arith.constant 0 : i32
    %c0_i32_1 = arith.constant 0 : i32
    return %c0_i32, %c0_i32_0 : i32, i32
  }
  func.func @transform_2(%arg0: i32) -> (i32, i32) {
    %c0_i32 = arith.constant 0 : i32
    %c0_i32_0 = arith.constant 0 : i32
    %c0_i32_1 = arith.constant 0 : i32
    return %c0_i32, %c0_i32_0 : i32, i32
  }
  func.func @transform_3(%arg0: i32) -> (i32, i32) {
    %c0_i32 = arith.constant 0 : i32
    %c0_i32_0 = arith.constant 0 : i32
    %c0_i32_1 = arith.constant 0 : i32
    return %c0_i32, %c0_i32_0 : i32, i32
  }
  func.func @transform_4(%arg0: i32) -> (i32, i32) {
    %c0_i32 = arith.constant 0 : i32
    %c0_i32_0 = arith.constant 0 : i32
    %c0_i32_1 = arith.constant 0 : i32
    return %c0_i32, %c0_i32_0 : i32, i32
  }
  func.func @transform_5(%arg0: i32) -> (i32, i32) {
    %c0_i32 = arith.constant 0 : i32
    %c0_i32_0 = arith.constant 0 : i32
    return %arg0, %c0_i32 : i32, i32
  }
}

</mosaic_0001>

<llo_original>
// kernel: tpu_custom_call.1
$region0: #{tpu_custom_call.1}
  #allocation0 [shape = 'u32[]', space=smem, size = 0x4, offset = 0x4, fixed_abs, tag = 'smem constant byte address 0x4 - core index']
  #allocation1 [shape = 'u32[72,128]{1,0:T(1,128)}', space=vmem, size = 0x9000, scoped, tag = 'internal scratch']
  %s0 = inlined_call_operand.vmem [shape: f32[512,32], index: 0, kind: input, shape index: {}]
  %s1 = inlined_call_operand.vmem [shape: f32[1,128], index: 1, kind: input, shape index: {}]
  %s2 = inlined_call_operand.vmem [shape: f32[32,128], index: 2, kind: input, shape index: {}]
  %s3 = inlined_call_operand.vmem [shape: f32[1,128], index: 3, kind: input, shape index: {}]
  %s4 = inlined_call_operand.vmem [shape: f32[128,128], index: 4, kind: input, shape index: {}]
  %s5 = inlined_call_operand.vmem [shape: f32[512,1], index: 5, kind: output, shape index: {}]
  %s6 = sld [smem:[#allocation0]]
  $region53: #{tpu_custom_call.1} parent=0
    _
  %s8 = ssub.s32 1, %s6
  %s9 = scalar_select 0, %s8, %s6
  loop: start=0, step=1, limit=4
  $region2: #{tpu_custom_call.1} parent=0 // loop_pre_header
    _
  $region3: #{tpu_custom_call.1} parent=0 // loop_header
    %s11 = sphi 0, %s15
    %p12 = scmp.ge.s32.totalorder %s11, 4
    %s21 = sphi 0, %s23
    %s24 = sphi 0, %s21
    %s25 = sphi 0, %s24
    %s41 = sphi 0, %s25
    %s45 = sphi 0, %s45
    %s47 = sphi 0, %s45
    %s48 = sphi 0, %s47
    %s62 = sphi 0, %s48
    %s66 = sphi 0, %s66
    %s68 = sphi 0, %s66
    %s69 = sphi 0, %s68
    %s83 = sphi 0, %s69
    %s87 = sphi 0, %s87
    %s89 = sphi 0, %s87
    %s90 = sphi 0, %s89
    %s104 = sphi 0, %s90
    %s108 = sphi 0, %s108
    %s110 = sphi 0, %s108
    %s111 = sphi 0, %s110
    %s125 = sphi 0, %s111
    %s131 = sphi 0, %s133
    %s134 = sphi 0, %s131
    %s135 = sphi 0, %s134
    %s151 = sphi 0, %s135
  $region4: #{tpu_custom_call.1} parent=0 // loop_header_branch
    %14 = sbr.rel (%p12) target = $region8
  $region5: #{tpu_custom_call.1} parent=0 // loop_body
    %s16 = ssub.s32 %s11, 1
    %s17 = ssub.s32 %s11, 2
    %s18 = sadd.s32 %s11, 1
    %s19 = ssub.s32 %s11, %s18
    %p20 = scmp.eq.s32.totalorder %s19, 0
    %s22 = sadd.s32 %s21, 1
    %s23 = scalar_select %p20, %s21, %s22
    %p26 = pneg %p20
    %p27 = scmp.eq.s32.totalorder %s11, 1
    %p28 = por %p26, %p27
    %p29 = scmp.ne.s32.totalorder %s21, %s24
    %p30 = scmp.eq.s32.totalorder %s11, 0
    %p31 = por %p29, %p30
    %p32 = scmp.ne.s32.totalorder %s21, %s24
    %p33 = scmp.eq.s32.totalorder %s16, 1
    %p34 = por %p32, %p33
    %p35 = scmp.ne.s32.totalorder %s24, %s25
    %p36 = scmp.eq.s32.totalorder %s16, 0
    %p37 = por %p35, %p36
    %p38 = scmp.ne.s32.totalorder %s24, %s25
    %p39 = scmp.eq.s32.totalorder %s17, 1
    %p40 = por %p38, %p39
    %p42 = scmp.ne.s32.totalorder %s25, %s41
    %p43 = scmp.eq.s32.totalorder %s17, 0
    %p44 = por %p42, %p43
    %s46 = sadd.s32 %s45, 1
    %p49 = scmp.eq.s32.totalorder %s11, 1
    %p50 = scmp.ne.s32.totalorder %s45, %s47
    %p51 = scmp.eq.s32.totalorder %s11, 0
    %p52 = por %p50, %p51
    %p53 = scmp.ne.s32.totalorder %s45, %s47
    %p54 = scmp.eq.s32.totalorder %s16, 1
    %p55 = por %p53, %p54
    %p56 = scmp.ne.s32.totalorder %s47, %s48
    %p57 = scmp.eq.s32.totalorder %s16, 0
    %p58 = por %p56, %p57
    %p59 = scmp.ne.s32.totalorder %s47, %s48
    %p60 = scmp.eq.s32.totalorder %s17, 1
    %p61 = por %p59, %p60
    %p63 = scmp.ne.s32.totalorder %s48, %s62
    %p64 = scmp.eq.s32.totalorder %s17, 0
    %p65 = por %p63, %p64
    %s67 = sadd.s32 %s66, 1
    %p70 = scmp.eq.s32.totalorder %s11, 1
    %p71 = scmp.ne.s32.totalorder %s66, %s68
    %p72 = scmp.eq.s32.totalorder %s11, 0
    %p73 = por %p71, %p72
    %p74 = scmp.ne.s32.totalorder %s66, %s68
    %p75 = scmp.eq.s32.totalorder %s16, 1
    %p76 = por %p74, %p75
    %p77 = scmp.ne.s32.totalorder %s68, %s69
    %p78 = scmp.eq.s32.totalorder %s16, 0
    %p79 = por %p77, %p78
    %p80 = scmp.ne.s32.totalorder %s68, %s69
    %p81 = scmp.eq.s32.totalorder %s17, 1
    %p82 = por %p80, %p81
    %p84 = scmp.ne.s32.totalorder %s69, %s83
    %p85 = scmp.eq.s32.totalorder %s17, 0
    %p86 = por %p84, %p85
    %s88 = sadd.s32 %s87, 1
    %p91 = scmp.eq.s32.totalorder %s11, 1
    %p92 = scmp.ne.s32.totalorder %s87, %s89
    %p93 = scmp.eq.s32.totalorder %s11, 0
    %p94 = por %p92, %p93
    %p95 = scmp.ne.s32.totalorder %s87, %s89
    %p96 = scmp.eq.s32.totalorder %s16, 1
    %p97 = por %p95, %p96
    %p98 = scmp.ne.s32.totalorder %s89, %s90
    %p99 = scmp.eq.s32.totalorder %s16, 0
    %p100 = por %p98, %p99
    %p101 = scmp.ne.s32.totalorder %s89, %s90
    %p102 = scmp.eq.s32.totalorder %s17, 1
    %p103 = por %p101, %p102
    %p105 = scmp.ne.s32.totalorder %s90, %s104
    %p106 = scmp.eq.s32.totalorder %s17, 0
    %p107 = por %p105, %p106
    %s109 = sadd.s32 %s108, 1
    %p112 = scmp.eq.s32.totalorder %s11, 1
    %p113 = scmp.ne.s32.totalorder %s108, %s110
    %p114 = scmp.eq.s32.totalorder %s11, 0
    %p115 = por %p113, %p114
    %p116 = scmp.ne.s32.totalorder %s108, %s110
    %p117 = scmp.eq.s32.totalorder %s16, 1
    %p118 = por %p116, %p117
    %p119 = scmp.ne.s32.totalorder %s110, %s111
    %p120 = scmp.eq.s32.totalorder %s16, 0
    %p121 = por %p119, %p120
    %p122 = scmp.ne.s32.totalorder %s110, %s111
    %p123 = scmp.eq.s32.totalorder %s17, 1
    %p124 = por %p122, %p123
    %p126 = scmp.ne.s32.totalorder %s111, %s125
    %p127 = scmp.eq.s32.totalorder %s17, 0
    %p128 = por %p126, %p127
    %s129 = ssub.s32 %s11, %s18
    %p130 = scmp.eq.s32.totalorder %s129, 0
    %s132 = sadd.s32 %s131, 1
    %s133 = scalar_select %p130, %s131, %s132
    %p136 = pneg %p130
    %p137 = scmp.eq.s32.totalorder %s11, 1
    %p138 = por %p136, %p137
    %p139 = scmp.ne.s32.totalorder %s131, %s134
    %p140 = scmp.eq.s32.totalorder %s11, 0
    %p141 = por %p139, %p140
    %p142 = scmp.ne.s32.totalorder %s131, %s134
    %p143 = scmp.eq.s32.totalorder %s16, 1
    %p144 = por %p142, %p143
    %p145 = scmp.ne.s32.totalorder %s134, %s135
    %p146 = scmp.eq.s32.totalorder %s16, 0
    %p147 = por %p145, %p146
    %p148 = scmp.ne.s32.totalorder %s134, %s135
    %p149 = scmp.eq.s32.totalorder %s17, 1
    %p150 = por %p148, %p149
    %p152 = scmp.ne.s32.totalorder %s135, %s151
    %p153 = scmp.eq.s32.totalorder %s17, 0
    %p154 = por %p152, %p153
    %p155 = scmp.le.s32.totalorder 1, %s11
    %p156 = scmp.lt.s32.totalorder %s11, 3
    %p157 = pnand %p155, %p156
    %p158 = pneg %p157
    // Predicated region
    $region9: #{tpu_custom_call.1} parent=5 // pred_check
      _
    $region10: #{tpu_custom_call.1} parent=5 // pred_check_branch
      %160 = sbr.rel (%p157) target = $region12
    $region11: #{tpu_custom_call.1} parent=5 // pred_region
      %s161 = ssub.s32 %s11, 1
      // Predicated region
      $region13: #{tpu_custom_call.1} parent=11 // pred_check
        %p162 = pneg %p58
      $region14: #{tpu_custom_call.1} parent=11 // pred_check_branch
        %164 = sbr.rel (%p162) target = $region16
      $region15: #{tpu_custom_call.1} parent=11 // pred_region
        _
      $region16: #{tpu_custom_call.1} parent=11 // pred_fallthru
        _
      // Predicated region
      $region17: #{tpu_custom_call.1} parent=11 // pred_check
        %p165 = pneg %p79
      $region18: #{tpu_custom_call.1} parent=11 // pred_check_branch
        %167 = sbr.rel (%p165) target = $region20
      $region19: #{tpu_custom_call.1} parent=11 // pred_region
        _
      $region20: #{tpu_custom_call.1} parent=11 // pred_fallthru
        _
      // Predicated region
      $region21: #{tpu_custom_call.1} parent=11 // pred_check
        %p168 = pneg %p100
      $region22: #{tpu_custom_call.1} parent=11 // pred_check_branch
        %170 = sbr.rel (%p168) target = $region24
      $region23: #{tpu_custom_call.1} parent=11 // pred_region
        _
      $region24: #{tpu_custom_call.1} parent=11 // pred_fallthru
        _
      // Predicated region
      $region25: #{tpu_custom_call.1} parent=11 // pred_check
        %p171 = pneg %p121
      $region26: #{tpu_custom_call.1} parent=11 // pred_check_branch
        %173 = sbr.rel (%p171) target = $region28
      $region27: #{tpu_custom_call.1} parent=11 // pred_region
        _
      $region28: #{tpu_custom_call.1} parent=11 // pred_fallthru
        _
    $region12: #{tpu_custom_call.1} parent=5 // pred_fallthru
      _
    %p174 = scmp.lt.s32.totalorder %s11, 2
    // Predicated region
    $region29: #{tpu_custom_call.1} parent=5 // pred_check
      %p175 = pneg %p174
    $region30: #{tpu_custom_call.1} parent=5 // pred_check_branch
      %177 = sbr.rel (%p175) target = $region32
    $region31: #{tpu_custom_call.1} parent=5 // pred_region
      // Predicated region
      $region33: #{tpu_custom_call.1} parent=31 // pred_check
        %p178 = pneg %p31
      $region34: #{tpu_custom_call.1} parent=31 // pred_check_branch
        %180 = sbr.rel (%p178) target = $region36
      $region35: #{tpu_custom_call.1} parent=31 // pred_region
        %s181 = smul.u32 32, %s11
        %p182 = scmp.lt.s32.totalorder %s181, 63
        %s183 = scalar_select %p182, %s181, 63
        %s184 = smul.addr %s183, 8
        %s185 = scalar_lea.vmem %s0, %s184
        %s186 = smul.u32 32, %s11
      $region36: #{tpu_custom_call.1} parent=31 // pred_fallthru
        _
    $region32: #{tpu_custom_call.1} parent=5 // pred_fallthru
      _
    %p187 = scmp.le.s32.totalorder 1, %s11
    %p188 = scmp.lt.s32.totalorder %s11, 3
    %p189 = pnand %p187, %p188
    %p190 = pneg %p189
    // Predicated region
    $region37: #{tpu_custom_call.1} parent=5 // pred_check
      _
    $region38: #{tpu_custom_call.1} parent=5 // pred_check_branch
      %192 = sbr.rel (%p189) target = $region40
    $region39: #{tpu_custom_call.1} parent=5 // pred_region
      %s193 = ssub.s32 %s11, 1
      %s194 = smul.u32 32, %s16
      %p195 = scmp.lt.s32.totalorder %s194, 63
      %s196 = scalar_select %p195, %s194, 63
      %s197 = smul.addr %s196, 8
      %s198 = scalar_lea.vmem %s0, %s197
      %p199 = pneg %p37
      %p200 = pneg %p34
      %p201 = pneg %p58
      %p202 = pneg %p55
      %p203 = pneg %p79
      %p204 = pneg %p76
      %p205 = pneg %p100
      %p206 = pneg %p97
      %p207 = pneg %p121
      %p208 = pneg %p118
      %p209 = pneg %p147
      %p210 = pneg %p144
      %s211 = smul.u32 32, %s16
      %p212 = scmp.lt.s32.totalorder %s211, 63
      %s213 = scalar_select %p212, %s211, 63
      %s214 = smul.addr %s213, 8
      %s215 = scalar_lea.vmem %s5, %s214
      %s216 = smul.u32 32, %s16
      %p217 = scmp.lt.s32.totalorder %s216, 63
      %s218 = scalar_select %p217, %s216, 63
      %s219 = smul.addr %s218, 8
      %s220 = scalar_lea.vmem %s0, %s219
      %s221 = smul.u32 32, %s16
      %s222 = smul.u32 32, %s16
      %p223 = scmp.lt.s32.totalorder %s222, 63
      %s224 = scalar_select %p223, %s222, 63
      %s225 = smul.addr %s224, 8
      %s226 = scalar_lea.vmem %s5, %s225
      %s227 = smul.u32 32, %s16
      %v228 = vld [vmem:[%s220] sm:$0xff]
      %v229 = vld [vmem:[%s220 + $0x8] sm:$0xff]
      %v230 = vld [vmem:[%s220 + $0x10] sm:$0xff]
      %v231 = vld [vmem:[%s220 + $0x18] sm:$0xff]
      %v232 = vld [vmem:[%s220 + $0x20] sm:$0xff]
      %v233 = vld [vmem:[%s220 + $0x28] sm:$0xff]
      %v234 = vld [vmem:[%s220 + $0x30] sm:$0xff]
      %v235 = vld [vmem:[%s220 + $0x38] sm:$0xff]
      %v236 = vld [vmem:[%s220 + $0x40] sm:$0xff]
      %v237 = vld [vmem:[%s220 + $0x48] sm:$0xff]
      %v238 = vld [vmem:[%s220 + $0x50] sm:$0xff]
      %v239 = vld [vmem:[%s220 + $0x58] sm:$0xff]
      %v240 = vld [vmem:[%s220 + $0x60] sm:$0xff]
      %v241 = vld [vmem:[%s220 + $0x68] sm:$0xff]
      %v242 = vld [vmem:[%s220 + $0x70] sm:$0xff]
      %v243 = vld [vmem:[%s220 + $0x78] sm:$0xff]
      %v244 = vld [vmem:[%s220 + $0x80] sm:$0xff]
      %v245 = vld [vmem:[%s220 + $0x88] sm:$0xff]
      %v246 = vld [vmem:[%s220 + $0x90] sm:$0xff]
      %v247 = vld [vmem:[%s220 + $0x98] sm:$0xff]
      %v248 = vld [vmem:[%s220 + $0xa0] sm:$0xff]
      %v249 = vld [vmem:[%s220 + $0xa8] sm:$0xff]
      %v250 = vld [vmem:[%s220 + $0xb0] sm:$0xff]
      %v251 = vld [vmem:[%s220 + $0xb8] sm:$0xff]
      %v252 = vld [vmem:[%s220 + $0xc0] sm:$0xff]
      %v253 = vld [vmem:[%s220 + $0xc8] sm:$0xff]
      %v254 = vld [vmem:[%s220 + $0xd0] sm:$0xff]
      %v255 = vld [vmem:[%s220 + $0xd8] sm:$0xff]
      %v256 = vld [vmem:[%s220 + $0xe0] sm:$0xff]
      %v257 = vld [vmem:[%s220 + $0xe8] sm:$0xff]
      %v258 = vld [vmem:[%s220 + $0xf0] sm:$0xff]
      %v259 = vld [vmem:[%s220 + $0xf8] sm:$0xff]
      %v260 = vld [vmem:[%s2] sm:$0xff]
      %v261 = vld [vmem:[%s2 + $0x8] sm:$0xff]
      %v262 = vld [vmem:[%s2 + $0x10] sm:$0xff]
      %v263 = vld [vmem:[%s2 + $0x18] sm:$0xff]
      %v264 = vld [vmem:[%s3] sm:$0x1]
      %v266 = vperm.slane %v264, 0
      %vm268 = vcmask 261120
      %v270 = vsel %vm268, %v228, 0
      %v273 = vsel %vm268, %v229, 0
      %v276 = vsel %vm268, %v230, 0
      %v279 = vsel %vm268, %v231, 0
      %v282 = vsel %vm268, %v232, 0
      %v285 = vsel %vm268, %v233, 0
      %v288 = vsel %vm268, %v234, 0
      %v291 = vsel %vm268, %v235, 0
      %v294 = vsel %vm268, %v236, 0
      %v297 = vsel %vm268, %v237, 0
      %v300 = vsel %vm268, %v238, 0
      %v303 = vsel %vm268, %v239, 0
      %v306 = vsel %vm268, %v240, 0
      %v309 = vsel %vm268, %v241, 0
      %v312 = vsel %vm268, %v242, 0
      %v315 = vsel %vm268, %v243, 0
      %v318 = vsel %vm268, %v244, 0
      %v321 = vsel %vm268, %v245, 0
      %v324 = vsel %vm268, %v246, 0
      %v327 = vsel %vm268, %v247, 0
      %v330 = vsel %vm268, %v248, 0
      %v333 = vsel %vm268, %v249, 0
      %v336 = vsel %vm268, %v250, 0
      %v339 = vsel %vm268, %v251, 0
      %v342 = vsel %vm268, %v252, 0
      %v345 = vsel %vm268, %v253, 0
      %v348 = vsel %vm268, %v254, 0
      %v351 = vsel %vm268, %v255, 0
      %v354 = vsel %vm268, %v256, 0
      %v357 = vsel %vm268, %v257, 0
      %v360 = vsel %vm268, %v258, 0
      %v363 = vsel %vm268, %v259, 0
      %365 = vmatpush.msra.mxu0 0.0
      %366 = vmatpush.msra.mxu0 0.0
      %367 = vmatpush.msra.mxu0 0.0
      %368 = vmatpush.msra.mxu0 0.0
      %369 = vmatpush.msra.mxu0 0.0
      %370 = vmatpush.msra.mxu0 0.0
      %371 = vmatpush.msra.mxu0 0.0
      %372 = vmatpush.msra.mxu0 0.0
      %373 = vmatpush.msra.mxu0 0.0
      %374 = vmatpush.msra.mxu0 0.0
      %375 = vmatpush.msra.mxu0 0.0
      %376 = vmatpush.msra.mxu0 0.0
      %377 = vmatpush.msra.mxu0 %v263
      %378 = vmatpush.msra.mxu0 %v262
      %379 = vmatpush.msra.mxu0 %v261
      %380 = vmatpush.msra.mxu0 %v260
      %381 = vmatmul.f32.gmra.mxu0 %v270
      %v382 = vpop.f32.mrf.mxu0
      %v383 = vadd.f32 %v266, %v382
      %384 = vmatmul.f32.gmra.mxu0 %v273
      %v385 = vpop.f32.mrf.mxu0
      %v386 = vadd.f32 %v266, %v385
      %387 = vmatmul.f32.gmra.mxu0 %v276
      %v388 = vpop.f32.mrf.mxu0
      %v389 = vadd.f32 %v266, %v388
      %390 = vmatmul.f32.gmra.mxu0 %v279
      %v391 = vpop.f32.mrf.mxu0
      %v392 = vadd.f32 %v266, %v391
      %393 = vmatmul.f32.gmra.mxu0 %v282
      %v394 = vpop.f32.mrf.mxu0
      %v395 = vadd.f32 %v266, %v394
      %396 = vmatmul.f32.gmra.mxu0 %v285
      %v397 = vpop.f32.mrf.mxu0
      %v398 = vadd.f32 %v266, %v397
      %399 = vmatmul.f32.gmra.mxu0 %v288
      %v400 = vpop.f32.mrf.mxu0
      %v401 = vadd.f32 %v266, %v400
      %402 = vmatmul.f32.gmra.mxu0 %v291
      %v403 = vpop.f32.mrf.mxu0
      %v404 = vadd.f32 %v266, %v403
      %405 = vmatmul.f32.gmra.mxu0 %v294
      %v406 = vpop.f32.mrf.mxu0
      %v407 = vadd.f32 %v266, %v406
      %408 = vmatmul.f32.gmra.mxu0 %v297
      %v409 = vpop.f32.mrf.mxu0
      %v410 = vadd.f32 %v266, %v409
      %411 = vmatmul.f32.gmra.mxu0 %v300
      %v412 = vpop.f32.mrf.mxu0
      %v413 = vadd.f32 %v266, %v412
      %414 = vmatmul.f32.gmra.mxu0 %v303
      %v415 = vpop.f32.mrf.mxu0
      %v416 = vadd.f32 %v266, %v415
      %417 = vmatmul.f32.gmra.mxu0 %v306
      %v418 = vpop.f32.mrf.mxu0
      %v419 = vadd.f32 %v266, %v418
      %420 = vmatmul.f32.gmra.mxu0 %v309
      %v421 = vpop.f32.mrf.mxu0
      %v422 = vadd.f32 %v266, %v421
      %423 = vmatmul.f32.gmra.mxu0 %v312
      %v424 = vpop.f32.mrf.mxu0
      %v425 = vadd.f32 %v266, %v424
      %426 = vmatmul.f32.gmra.mxu0 %v315
      %v427 = vpop.f32.mrf.mxu0
      %v428 = vadd.f32 %v266, %v427
      %429 = vmatmul.f32.gmra.mxu0 %v318
      %v430 = vpop.f32.mrf.mxu0
      %v431 = vadd.f32 %v266, %v430
      %432 = vmatmul.f32.gmra.mxu0 %v321
      %v433 = vpop.f32.mrf.mxu0
      %v434 = vadd.f32 %v266, %v433
      %435 = vmatmul.f32.gmra.mxu0 %v324
      %v436 = vpop.f32.mrf.mxu0
      %v437 = vadd.f32 %v266, %v436
      %438 = vmatmul.f32.gmra.mxu0 %v327
      %v439 = vpop.f32.mrf.mxu0
      %v440 = vadd.f32 %v266, %v439
      %441 = vmatmul.f32.gmra.mxu0 %v330
      %v442 = vpop.f32.mrf.mxu0
      %v443 = vadd.f32 %v266, %v442
      %444 = vmatmul.f32.gmra.mxu0 %v333
      %v445 = vpop.f32.mrf.mxu0
      %v446 = vadd.f32 %v266, %v445
      %447 = vmatmul.f32.gmra.mxu0 %v336
      %v448 = vpop.f32.mrf.mxu0
      %v449 = vadd.f32 %v266, %v448
      %450 = vmatmul.f32.gmra.mxu0 %v339
      %v451 = vpop.f32.mrf.mxu0
      %v452 = vadd.f32 %v266, %v451
      %453 = vmatmul.f32.gmra.mxu0 %v342
      %v454 = vpop.f32.mrf.mxu0
      %v455 = vadd.f32 %v266, %v454
      %456 = vmatmul.f32.gmra.mxu0 %v345
      %v457 = vpop.f32.mrf.mxu0
      %v458 = vadd.f32 %v266, %v457
      %459 = vmatmul.f32.gmra.mxu0 %v348
      %v460 = vpop.f32.mrf.mxu0
      %v461 = vadd.f32 %v266, %v460
      %462 = vmatmul.f32.gmra.mxu0 %v351
      %v463 = vpop.f32.mrf.mxu0
      %v464 = vadd.f32 %v266, %v463
      %465 = vmatmul.f32.gmra.mxu0 %v354
      %v466 = vpop.f32.mrf.mxu0
      %v467 = vadd.f32 %v266, %v466
      %468 = vmatmul.f32.gmra.mxu0 %v357
      %v469 = vpop.f32.mrf.mxu0
      %v470 = vadd.f32 %v266, %v469
      %471 = vmatmul.f32.gmra.mxu0 %v360
      %v472 = vpop.f32.mrf.mxu0
      %v473 = vadd.f32 %v266, %v472
      %474 = vmatmul.f32.gmra.mxu0 %v363
      %v475 = vpop.f32.mrf.mxu0
      %v476 = vadd.f32 %v266, %v475
      %477 = vdwg.mxu0
      %v478 = vtanh.pop %v383
      %v479 = vtanh.pop %v386
      %v480 = vtanh.pop %v389
      %v481 = vtanh.pop %v392
      %v482 = vtanh.pop %v395
      %v483 = vtanh.pop %v398
      %v484 = vtanh.pop %v401
      %v485 = vtanh.pop %v404
      %v486 = vtanh.pop %v407
      %v487 = vtanh.pop %v410
      %v488 = vtanh.pop %v413
      %v489 = vtanh.pop %v416
      %v490 = vtanh.pop %v419
      %v491 = vtanh.pop %v422
      %v492 = vtanh.pop %v425
      %v493 = vtanh.pop %v428
      %v494 = vtanh.pop %v431
      %v495 = vtanh.pop %v434
      %v496 = vtanh.pop %v437
      %v497 = vtanh.pop %v440
      %v498 = vtanh.pop %v443
      %v499 = vtanh.pop %v446
      %v500 = vtanh.pop %v449
      %v501 = vtanh.pop %v452
      %v502 = vtanh.pop %v455
      %v503 = vtanh.pop %v458
      %v504 = vtanh.pop %v461
      %v505 = vtanh.pop %v464
      %v506 = vtanh.pop %v467
      %v507 = vtanh.pop %v470
      %v508 = vtanh.pop %v473
      %v509 = vtanh.pop %v476
      %v510 = vld [vmem:[%s4] sm:$0xff]
      %v511 = vld [vmem:[%s4 + $0x8] sm:$0xff]
      %v512 = vld [vmem:[%s4 + $0x10] sm:$0xff]
      %v513 = vld [vmem:[%s4 + $0x18] sm:$0xff]
      %v514 = vld [vmem:[%s4 + $0x20] sm:$0xff]
      %v515 = vld [vmem:[%s4 + $0x28] sm:$0xff]
      %v516 = vld [vmem:[%s4 + $0x30] sm:$0xff]
      %v517 = vld [vmem:[%s4 + $0x38] sm:$0xff]
      %v518 = vld [vmem:[%s4 + $0x40] sm:$0xff]
      %v519 = vld [vmem:[%s4 + $0x48] sm:$0xff]
      %v520 = vld [vmem:[%s4 + $0x50] sm:$0xff]
      %v521 = vld [vmem:[%s4 + $0x58] sm:$0xff]
      %v522 = vld [vmem:[%s4 + $0x60] sm:$0xff]
      %v523 = vld [vmem:[%s4 + $0x68] sm:$0xff]
      %v524 = vld [vmem:[%s4 + $0x70] sm:$0xff]
      %v525 = vld [vmem:[%s4 + $0x78] sm:$0xff]
      %526 = vmatpush.msra.mxu0 %v525
      %527 = vmatpush.msra.mxu0 %v524
      %528 = vmatpush.msra.mxu0 %v523
      %529 = vmatpush.msra.mxu0 %v522
      %530 = vmatpush.msra.mxu0 %v521
      %531 = vmatpush.msra.mxu0 %v520
      %532 = vmatpush.msra.mxu0 %v519
      %533 = vmatpush.msra.mxu0 %v518
      %534 = vmatpush.msra.mxu0 %v517
      %535 = vmatpush.msra.mxu0 %v516
      %536 = vmatpush.msra.mxu0 %v515
      %537 = vmatpush.msra.mxu0 %v514
      %538 = vmatpush.msra.mxu0 %v513
      %539 = vmatpush.msra.mxu0 %v512
      %540 = vmatpush.msra.mxu0 %v511
      %541 = vmatpush.msra.mxu0 %v510
      %542 = vmatmul.f32.gmra.mxu0 %v478
      %v543 = vpop.f32.mrf.mxu0
      %v544 = vadd.f32 0.0, %v543
      %545 = vmatmul.f32.gmra.mxu0 %v479
      %v546 = vpop.f32.mrf.mxu0
      %v547 = vadd.f32 0.0, %v546
      %548 = vmatmul.f32.gmra.mxu0 %v480
      %v549 = vpop.f32.mrf.mxu0
      %v550 = vadd.f32 0.0, %v549
      %551 = vmatmul.f32.gmra.mxu0 %v481
      %v552 = vpop.f32.mrf.mxu0
      %v553 = vadd.f32 0.0, %v552
      %554 = vmatmul.f32.gmra.mxu0 %v482
      %v555 = vpop.f32.mrf.mxu0
      %v556 = vadd.f32 0.0, %v555
      %557 = vmatmul.f32.gmra.mxu0 %v483
      %v558 = vpop.f32.mrf.mxu0
      %v559 = vadd.f32 0.0, %v558
      %560 = vmatmul.f32.gmra.mxu0 %v484
      %v561 = vpop.f32.mrf.mxu0
      %v562 = vadd.f32 0.0, %v561
      %563 = vmatmul.f32.gmra.mxu0 %v485
      %v564 = vpop.f32.mrf.mxu0
      %v565 = vadd.f32 0.0, %v564
      %566 = vmatmul.f32.gmra.mxu0 %v486
      %v567 = vpop.f32.mrf.mxu0
      %v568 = vadd.f32 0.0, %v567
      %569 = vmatmul.f32.gmra.mxu0 %v487
      %v570 = vpop.f32.mrf.mxu0
      %v571 = vadd.f32 0.0, %v570
      %572 = vmatmul.f32.gmra.mxu0 %v488
      %v573 = vpop.f32.mrf.mxu0
      %v574 = vadd.f32 0.0, %v573
      %575 = vmatmul.f32.gmra.mxu0 %v489
      %v576 = vpop.f32.mrf.mxu0
      %v577 = vadd.f32 0.0, %v576
      %578 = vmatmul.f32.gmra.mxu0 %v490
      %v579 = vpop.f32.mrf.mxu0
      %v580 = vadd.f32 0.0, %v579
      %581 = vmatmul.f32.gmra.mxu0 %v491
      %v582 = vpop.f32.mrf.mxu0
      %v583 = vadd.f32 0.0, %v582
      %584 = vmatmul.f32.gmra.mxu0 %v492
      %v585 = vpop.f32.mrf.mxu0
      %v586 = vadd.f32 0.0, %v585
      %587 = vmatmul.f32.gmra.mxu0 %v493
      %v588 = vpop.f32.mrf.mxu0
      %v589 = vadd.f32 0.0, %v588
      %590 = vmatmul.f32.gmra.mxu0 %v494
      %v591 = vpop.f32.mrf.mxu0
      %v592 = vadd.f32 0.0, %v591
      %593 = vmatmul.f32.gmra.mxu0 %v495
      %v594 = vpop.f32.mrf.mxu0
      %v595 = vadd.f32 0.0, %v594
      %596 = vmatmul.f32.gmra.mxu0 %v496
      %v597 = vpop.f32.mrf.mxu0
      %v598 = vadd.f32 0.0, %v597
      %599 = vmatmul.f32.gmra.mxu0 %v497
      %v600 = vpop.f32.mrf.mxu0
      %v601 = vadd.f32 0.0, %v600
      %602 = vmatmul.f32.gmra.mxu0 %v498
      %v603 = vpop.f32.mrf.mxu0
      %v604 = vadd.f32 0.0, %v603
      %605 = vmatmul.f32.gmra.mxu0 %v499
      %v606 = vpop.f32.mrf.mxu0
      %v607 = vadd.f32 0.0, %v606
      %608 = vmatmul.f32.gmra.mxu0 %v500
      %v609 = vpop.f32.mrf.mxu0
      %v610 = vadd.f32 0.0, %v609
      %611 = vmatmul.f32.gmra.mxu0 %v501
      %v612 = vpop.f32.mrf.mxu0
      %v613 = vadd.f32 0.0, %v612
      %614 = vmatmul.f32.gmra.mxu0 %v502
      %v615 = vpop.f32.mrf.mxu0
      %v616 = vadd.f32 0.0, %v615
      %617 = vmatmul.f32.gmra.mxu0 %v503
      %v618 = vpop.f32.mrf.mxu0
      %v619 = vadd.f32 0.0, %v618
      %620 = vmatmul.f32.gmra.mxu0 %v504
      %v621 = vpop.f32.mrf.mxu0
      %v622 = vadd.f32 0.0, %v621
      %623 = vmatmul.f32.gmra.mxu0 %v505
      %v624 = vpop.f32.mrf.mxu0
      %v625 = vadd.f32 0.0, %v624
      %626 = vmatmul.f32.gmra.mxu0 %v506
      %v627 = vpop.f32.mrf.mxu0
      %v628 = vadd.f32 0.0, %v627
      %629 = vmatmul.f32.gmra.mxu0 %v507
      %v630 = vpop.f32.mrf.mxu0
      %v631 = vadd.f32 0.0, %v630
      %632 = vmatmul.f32.gmra.mxu0 %v508
      %v633 = vpop.f32.mrf.mxu0
      %v634 = vadd.f32 0.0, %v633
      %635 = vmatmul.f32.gmra.mxu0 %v509
      %v636 = vpop.f32.mrf.mxu0
      %v637 = vadd.f32 0.0, %v636
      %638 = vdwg.mxu0
      %v639 = vld [vmem:[%s1] sm:$0x1]
      %v641 = vperm.slane %v639, 0
      %v643 = vsub.f32 %v544, %v641
      %v644 = vsub.f32 %v547, %v641
      %v645 = vsub.f32 %v550, %v641
      %v646 = vsub.f32 %v553, %v641
      %v647 = vsub.f32 %v556, %v641
      %v648 = vsub.f32 %v559, %v641
      %v649 = vsub.f32 %v562, %v641
      %v650 = vsub.f32 %v565, %v641
      %v651 = vsub.f32 %v568, %v641
      %v652 = vsub.f32 %v571, %v641
      %v653 = vsub.f32 %v574, %v641
      %v654 = vsub.f32 %v577, %v641
      %v655 = vsub.f32 %v580, %v641
      %v656 = vsub.f32 %v583, %v641
      %v657 = vsub.f32 %v586, %v641
      %v658 = vsub.f32 %v589, %v641
      %v659 = vsub.f32 %v592, %v641
      %v660 = vsub.f32 %v595, %v641
      %v661 = vsub.f32 %v598, %v641
      %v662 = vsub.f32 %v601, %v641
      %v663 = vsub.f32 %v604, %v641
      %v664 = vsub.f32 %v607, %v641
      %v665 = vsub.f32 %v610, %v641
      %v666 = vsub.f32 %v613, %v641
      %v667 = vsub.f32 %v616, %v641
      %v668 = vsub.f32 %v619, %v641
      %v669 = vsub.f32 %v622, %v641
      %v670 = vsub.f32 %v625, %v641
      %v671 = vsub.f32 %v628, %v641
      %v672 = vsub.f32 %v631, %v641
      %v673 = vsub.f32 %v634, %v641
      %v674 = vsub.f32 %v637, %v641
      %v675 = vmul.f32 %v643, %v643
      %v676 = vmul.f32 %v644, %v644
      %v677 = vmul.f32 %v645, %v645
      %v678 = vmul.f32 %v646, %v646
      %v679 = vmul.f32 %v647, %v647
      %v680 = vmul.f32 %v648, %v648
      %v681 = vmul.f32 %v649, %v649
      %v682 = vmul.f32 %v650, %v650
      %v683 = vmul.f32 %v651, %v651
      %v684 = vmul.f32 %v652, %v652
      %v685 = vmul.f32 %v653, %v653
      %v686 = vmul.f32 %v654, %v654
      %v687 = vmul.f32 %v655, %v655
      %v688 = vmul.f32 %v656, %v656
      %v689 = vmul.f32 %v657, %v657
      %v690 = vmul.f32 %v658, %v658
      %v691 = vmul.f32 %v659, %v659
      %v692 = vmul.f32 %v660, %v660
      %v693 = vmul.f32 %v661, %v661
      %v694 = vmul.f32 %v662, %v662
      %v695 = vmul.f32 %v663, %v663
      %v696 = vmul.f32 %v664, %v664
      %v697 = vmul.f32 %v665, %v665
      %v698 = vmul.f32 %v666, %v666
      %v699 = vmul.f32 %v667, %v667
      %v700 = vmul.f32 %v668, %v668
      %v701 = vmul.f32 %v669, %v669
      %v702 = vmul.f32 %v670, %v670
      %v703 = vmul.f32 %v671, %v671
      %v704 = vmul.f32 %v672, %v672
      %v705 = vmul.f32 %v673, %v673
      %v706 = vmul.f32 %v674, %v674
      %707 = vadd.xlane.f32.xlu0 %v675
      %v708 = vpop.xlane.xlu0 %707
      %709 = vadd.xlane.f32.xlu0 %v676
      %v710 = vpop.xlane.xlu0 %709
      %711 = vadd.xlane.f32.xlu0 %v677
      %v712 = vpop.xlane.xlu0 %711
      %713 = vadd.xlane.f32.xlu0 %v678
      %v714 = vpop.xlane.xlu0 %713
      %715 = vadd.xlane.f32.xlu0 %v679
      %v716 = vpop.xlane.xlu0 %715
      %717 = vadd.xlane.f32.xlu0 %v680
      %v718 = vpop.xlane.xlu0 %717
      %719 = vadd.xlane.f32.xlu0 %v681
      %v720 = vpop.xlane.xlu0 %719
      %721 = vadd.xlane.f32.xlu0 %v682
      %v722 = vpop.xlane.xlu0 %721
      %723 = vadd.xlane.f32.xlu0 %v683
      %v724 = vpop.xlane.xlu0 %723
      %725 = vadd.xlane.f32.xlu0 %v684
      %v726 = vpop.xlane.xlu0 %725
      %727 = vadd.xlane.f32.xlu0 %v685
      %v728 = vpop.xlane.xlu0 %727
      %729 = vadd.xlane.f32.xlu0 %v686
      %v730 = vpop.xlane.xlu0 %729
      %731 = vadd.xlane.f32.xlu0 %v687
      %v732 = vpop.xlane.xlu0 %731
      %733 = vadd.xlane.f32.xlu0 %v688
      %v734 = vpop.xlane.xlu0 %733
      %735 = vadd.xlane.f32.xlu0 %v689
      %v736 = vpop.xlane.xlu0 %735
      %737 = vadd.xlane.f32.xlu0 %v690
      %v738 = vpop.xlane.xlu0 %737
      %739 = vadd.xlane.f32.xlu0 %v691
      %v740 = vpop.xlane.xlu0 %739
      %741 = vadd.xlane.f32.xlu0 %v692
      %v742 = vpop.xlane.xlu0 %741
      %743 = vadd.xlane.f32.xlu0 %v693
      %v744 = vpop.xlane.xlu0 %743
      %745 = vadd.xlane.f32.xlu0 %v694
      %v746 = vpop.xlane.xlu0 %745
      %747 = vadd.xlane.f32.xlu0 %v695
      %v748 = vpop.xlane.xlu0 %747
      %749 = vadd.xlane.f32.xlu0 %v696
      %v750 = vpop.xlane.xlu0 %749
      %751 = vadd.xlane.f32.xlu0 %v697
      %v752 = vpop.xlane.xlu0 %751
      %753 = vadd.xlane.f32.xlu0 %v698
      %v754 = vpop.xlane.xlu0 %753
      %755 = vadd.xlane.f32.xlu0 %v699
      %v756 = vpop.xlane.xlu0 %755
      %757 = vadd.xlane.f32.xlu0 %v700
      %v758 = vpop.xlane.xlu0 %757
      %759 = vadd.xlane.f32.xlu0 %v701
      %v760 = vpop.xlane.xlu0 %759
      %761 = vadd.xlane.f32.xlu0 %v702
      %v762 = vpop.xlane.xlu0 %761
      %763 = vadd.xlane.f32.xlu0 %v703
      %v764 = vpop.xlane.xlu0 %763
      %765 = vadd.xlane.f32.xlu0 %v704
      %v766 = vpop.xlane.xlu0 %765
      %767 = vadd.xlane.f32.xlu0 %v705
      %v768 = vpop.xlane.xlu0 %767
      %769 = vadd.xlane.f32.xlu0 %v706
      %v770 = vpop.xlane.xlu0 %769
      %v771 = vmul.f32 %v708, -50.0
      %v772 = vmul.f32 %v710, -50.0
      %v773 = vmul.f32 %v712, -50.0
      %v774 = vmul.f32 %v714, -50.0
      %v775 = vmul.f32 %v716, -50.0
      %v776 = vmul.f32 %v718, -50.0
      %v777 = vmul.f32 %v720, -50.0
      %v778 = vmul.f32 %v722, -50.0
      %v779 = vmul.f32 %v724, -50.0
      %v780 = vmul.f32 %v726, -50.0
      %v781 = vmul.f32 %v728, -50.0
      %v782 = vmul.f32 %v730, -50.0
      %v783 = vmul.f32 %v732, -50.0
      %v784 = vmul.f32 %v734, -50.0
      %v785 = vmul.f32 %v736, -50.0
      %v786 = vmul.f32 %v738, -50.0
      %v787 = vmul.f32 %v740, -50.0
      %v788 = vmul.f32 %v742, -50.0
      %v789 = vmul.f32 %v744, -50.0
      %v790 = vmul.f32 %v746, -50.0
      %v791 = vmul.f32 %v748, -50.0
      %v792 = vmul.f32 %v750, -50.0
      %v793 = vmul.f32 %v752, -50.0
      %v794 = vmul.f32 %v754, -50.0
      %v795 = vmul.f32 %v756, -50.0
      %v796 = vmul.f32 %v758, -50.0
      %v797 = vmul.f32 %v760, -50.0
      %v798 = vmul.f32 %v762, -50.0
      %v799 = vmul.f32 %v764, -50.0
      %v800 = vmul.f32 %v766, -50.0
      %v801 = vmul.f32 %v768, -50.0
      %v802 = vmul.f32 %v770, -50.0
      %v803 = vadd.f32 %v771, 177.10677
      %v804 = vadd.f32 %v772, 177.10677
      %v805 = vadd.f32 %v773, 177.10677
      %v806 = vadd.f32 %v774, 177.10677
      %v807 = vadd.f32 %v775, 177.10677
      %v808 = vadd.f32 %v776, 177.10677
      %v809 = vadd.f32 %v777, 177.10677
      %v810 = vadd.f32 %v778, 177.10677
      %v811 = vadd.f32 %v779, 177.10677
      %v812 = vadd.f32 %v780, 177.10677
      %v813 = vadd.f32 %v781, 177.10677
      %v814 = vadd.f32 %v782, 177.10677
      %v815 = vadd.f32 %v783, 177.10677
      %v816 = vadd.f32 %v784, 177.10677
      %v817 = vadd.f32 %v785, 177.10677
      %v818 = vadd.f32 %v786, 177.10677
      %v819 = vadd.f32 %v787, 177.10677
      %v820 = vadd.f32 %v788, 177.10677
      %v821 = vadd.f32 %v789, 177.10677
      %v822 = vadd.f32 %v790, 177.10677
      %v823 = vadd.f32 %v791, 177.10677
      %v824 = vadd.f32 %v792, 177.10677
      %v825 = vadd.f32 %v793, 177.10677
      %v826 = vadd.f32 %v794, 177.10677
      %v827 = vadd.f32 %v795, 177.10677
      %v828 = vadd.f32 %v796, 177.10677
      %v829 = vadd.f32 %v797, 177.10677
      %v830 = vadd.f32 %v798, 177.10677
      %v831 = vadd.f32 %v799, 177.10677
      %v832 = vadd.f32 %v800, 177.10677
      %v833 = vadd.f32 %v801, 177.10677
      %v834 = vadd.f32 %v802, 177.10677
      %vm835 = vcmask 7168
      %836 = vst.msk [vmem:[%s226] sm:$0xff] %vm835, %v803
      %837 = vst.msk [vmem:[%s226 + $0x8] sm:$0xff] %vm835, %v804
      %838 = vst.msk [vmem:[%s226 + $0x10] sm:$0xff] %vm835, %v805
      %839 = vst.msk [vmem:[%s226 + $0x18] sm:$0xff] %vm835, %v806
      %840 = vst.msk [vmem:[%s226 + $0x20] sm:$0xff] %vm835, %v807
      %841 = vst.msk [vmem:[%s226 + $0x28] sm:$0xff] %vm835, %v808
      %842 = vst.msk [vmem:[%s226 + $0x30] sm:$0xff] %vm835, %v809
      %843 = vst.msk [vmem:[%s226 + $0x38] sm:$0xff] %vm835, %v810
      %844 = vst.msk [vmem:[%s226 + $0x40] sm:$0xff] %vm835, %v811
      %845 = vst.msk [vmem:[%s226 + $0x48] sm:$0xff] %vm835, %v812
      %846 = vst.msk [vmem:[%s226 + $0x50] sm:$0xff] %vm835, %v813
      %847 = vst.msk [vmem:[%s226 + $0x58] sm:$0xff] %vm835, %v814
      %848 = vst.msk [vmem:[%s226 + $0x60] sm:$0xff] %vm835, %v815
      %849 = vst.msk [vmem:[%s226 + $0x68] sm:$0xff] %vm835, %v816
      %850 = vst.msk [vmem:[%s226 + $0x70] sm:$0xff] %vm835, %v817
      %851 = vst.msk [vmem:[%s226 + $0x78] sm:$0xff] %vm835, %v818
      %852 = vst.msk [vmem:[%s226 + $0x80] sm:$0xff] %vm835, %v819
      %853 = vst.msk [vmem:[%s226 + $0x88] sm:$0xff] %vm835, %v820
      %854 = vst.msk [vmem:[%s226 + $0x90] sm:$0xff] %vm835, %v821
      %855 = vst.msk [vmem:[%s226 + $0x98] sm:$0xff] %vm835, %v822
      %856 = vst.msk [vmem:[%s226 + $0xa0] sm:$0xff] %vm835, %v823
      %857 = vst.msk [vmem:[%s226 + $0xa8] sm:$0xff] %vm835, %v824
      %858 = vst.msk [vmem:[%s226 + $0xb0] sm:$0xff] %vm835, %v825
      %859 = vst.msk [vmem:[%s226 + $0xb8] sm:$0xff] %vm835, %v826
      %860 = vst.msk [vmem:[%s226 + $0xc0] sm:$0xff] %vm835, %v827
      %861 = vst.msk [vmem:[%s226 + $0xc8] sm:$0xff] %vm835, %v828
      %862 = vst.msk [vmem:[%s226 + $0xd0] sm:$0xff] %vm835, %v829
      %863 = vst.msk [vmem:[%s226 + $0xd8] sm:$0xff] %vm835, %v830
      %864 = vst.msk [vmem:[%s226 + $0xe0] sm:$0xff] %vm835, %v831
      %865 = vst.msk [vmem:[%s226 + $0xe8] sm:$0xff] %vm835, %v832
      %866 = vst.msk [vmem:[%s226 + $0xf0] sm:$0xff] %vm835, %v833
      %867 = vst.msk [vmem:[%s226 + $0xf8] sm:$0xff] %vm835, %v834
      %s868 = smul.u32 32, %s16
      %p869 = scmp.lt.s32.totalorder %s868, 63
      %s870 = scalar_select %p869, %s868, 63
      %s871 = smul.addr %s870, 8
      %s872 = scalar_lea.vmem %s5, %s871
      // Predicated region
      $region41: #{tpu_custom_call.1} parent=39 // pred_check
        %p873 = pneg %p144
      $region42: #{tpu_custom_call.1} parent=39 // pred_check_branch
        %875 = sbr.rel (%p873) target = $region44
      $region43: #{tpu_custom_call.1} parent=39 // pred_region
        %s876 = smul.u32 32, %s16
      $region44: #{tpu_custom_call.1} parent=39 // pred_fallthru
        _
    $region40: #{tpu_custom_call.1} parent=5 // pred_fallthru
      _
    %p877 = scmp.le.s32.totalorder 2, %s11
    // Predicated region
    $region45: #{tpu_custom_call.1} parent=5 // pred_check
      %p878 = pneg %p877
    $region46: #{tpu_custom_call.1} parent=5 // pred_check_branch
      %880 = sbr.rel (%p878) target = $region48
    $region47: #{tpu_custom_call.1} parent=5 // pred_region
      %s881 = ssub.s32 %s11, 2
      // Predicated region
      $region49: #{tpu_custom_call.1} parent=47 // pred_check
        %p882 = pneg %p150
      $region50: #{tpu_custom_call.1} parent=47 // pred_check_branch
        %884 = sbr.rel (%p882) target = $region52
      $region51: #{tpu_custom_call.1} parent=47 // pred_region
        %s885 = smul.u32 32, %s17
        %p886 = scmp.lt.s32.totalorder %s885, 63
        %s887 = scalar_select %p886, %s885, 63
        %s888 = smul.addr %s887, 8
        %s889 = scalar_lea.vmem %s5, %s888
      $region52: #{tpu_custom_call.1} parent=47 // pred_fallthru
        _
    $region48: #{tpu_custom_call.1} parent=5 // pred_fallthru
      _
  $region6: #{tpu_custom_call.1} parent=0 // loop_footer
    %s15 = sadd.s32 1, %s11
  $region7: #{tpu_custom_call.1} parent=0 // loop_footer_branch
    %10 = sbr.rel target = $region3
  $region8: #{tpu_custom_call.1} parent=0 // loop_exit
    _

</llo_original>
